<compile_context>
chip_gen: v6e
topology: v6e:2x2x1
jax: 0.10.0
libtpu: 0.0.40
codegen_flags: <defaults>
</compile_context>

<pallas_src>
import functools

import numpy as np
import jax
import jax.numpy as jnp
from jax import lax
from jax.experimental import pallas as pl
from jax.experimental.pallas import tpu as pltpu

_LANE = 128
_SUBLANE = 8
_UNROLL_THRESHOLD = 8   # statically unroll the hidden-layer chain up to this depth
_FORI_UNROLL = 2        # unroll factor for the deep fori_loop path


def _cdiv(a, b):
    return -(-a // b)


def _round_up(n, m):
    return _cdiv(n, m) * m


def _pad_axis(a, axis, target):
    size = a.shape[axis]
    if size == target:
        return a
    widths = [(0, 0)] * a.ndim
    widths[axis] = (0, target - size)
    return jnp.pad(a, widths)


def _leaky_relu(x, coef):
    # max(x, coef*x) == leaky_relu(x) exactly for 0 < coef < 1 (mul+max, no select).
    return jnp.maximum(x, coef * x)


def _vmem_capacity_bytes():
    try:
        return int(pltpu.get_tpu_info().vmem_capacity_bytes)
    except Exception:
        return 64 * 2**20   # conservative (v7x-sized) fallback


# --------------------------------------------------------------------------- #
# Kernels
# --------------------------------------------------------------------------- #
def _mlp_resident_kernel(*refs, n_hidden_layers, leaky_relu_coef):
    """All weights VMEM-resident (constant index_maps, single-buffered)."""
    if n_hidden_layers > 0:
        (x_ref, w_in_ref, b_in_ref, w_hid_ref, b_hid_ref,
         w_out_ref, b_out_ref, o_ref) = refs
    else:
        x_ref, w_in_ref, b_in_ref, w_out_ref, b_out_ref, o_ref = refs
        w_hid_ref = b_hid_ref = None

    # Input layer + leaky relu (f32 accumulation on the MXU).
    h = jnp.dot(x_ref[...], w_in_ref[...],
                preferred_element_type=jnp.float32) + b_in_ref[...]
    h = _leaky_relu(h, leaky_relu_coef)

    if n_hidden_layers > 0:
        if n_hidden_layers <= _UNROLL_THRESHOLD:
            # Static unroll: LLO scheduler sees the whole layer chain.
            for l in range(n_hidden_layers):
                h = jnp.dot(h.astype(w_hid_ref.dtype), w_hid_ref[l],
                            preferred_element_type=jnp.float32) + b_hid_ref[l]
                h = _leaky_relu(h, leaky_relu_coef)
        else:
            # Deep: one loop body, dynamically indexing the stacked weights,
            # unrolled so consecutive layers overlap (slice load vs MXU drain).
            def body(l, hh):
                hh = jnp.dot(hh.astype(w_hid_ref.dtype), w_hid_ref[l],
                             preferred_element_type=jnp.float32) + b_hid_ref[l]
                return _leaky_relu(hh, leaky_relu_coef)
            h = lax.fori_loop(0, n_hidden_layers, body, h, unroll=_FORI_UNROLL)

    # Output layer (no activation); output tile is lane-dense (padded to 128).
    out = jnp.dot(h.astype(w_out_ref.dtype), w_out_ref[...],
                  preferred_element_type=jnp.float32) + b_out_ref[...]
    o_ref[...] = out.astype(o_ref.dtype)


def _mlp_streaming_kernel(x_ref, w_in_ref, b_in_ref, w_hid_hbm, b_hid_ref,
                          w_out_ref, b_out_ref, o_ref, w_buf, sem,
                          *, n_hidden_layers, leaky_relu_coef):
    """Hidden-layer weights too large for VMEM: stream them per layer from HBM
    with a 2-deep double buffer, prefetching layer l+1 during layer l's matmul."""

    def start_fetch(layer, slot):
        pltpu.make_async_copy(w_hid_hbm.at[layer], w_buf.at[slot], sem.at[slot]).start()

    def wait_fetch(slot):
        pltpu.make_async_copy(w_hid_hbm.at[0], w_buf.at[slot], sem.at[slot]).wait()

    start_fetch(0, 0)   # overlap layer-0 weight fetch with the input-layer matmul

    h = jnp.dot(x_ref[...], w_in_ref[...],
                preferred_element_type=jnp.float32) + b_in_ref[...]
    h = _leaky_relu(h, leaky_relu_coef)

    def body(l, hh):
        slot = l & 1
        wait_fetch(slot)

        @pl.when(l + 1 < n_hidden_layers)
        def _():
            start_fetch(l + 1, 1 - slot)

        hh = jnp.dot(hh.astype(w_buf.dtype), w_buf[slot],
                     preferred_element_type=jnp.float32) + b_hid_ref[l]
        return _leaky_relu(hh, leaky_relu_coef)

    h = lax.fori_loop(0, n_hidden_layers, body, h, unroll=_FORI_UNROLL)

    out = jnp.dot(h.astype(w_out_ref.dtype), w_out_ref[...],
                  preferred_element_type=jnp.float32) + b_out_ref[...]
    o_ref[...] = out.astype(o_ref.dtype)


# --------------------------------------------------------------------------- #
# Wrapper
# --------------------------------------------------------------------------- #
def model_perceptron_forward(x, params, *, n_hidden_layers, leaky_relu_coef=0.15,
                             compute_dtype=None, force_stream=False):
    """Forward pass of ModelPerceptron as a single fused Pallas kernel.

    params: dict with keys
        w_in  (Din, H)   b_in  (1, H)
        w_hid (L, H, H)  b_hid (L, 1, H)   (ignored when n_hidden_layers == 0)
        w_out (H, Dout)  b_out (1, Dout)
    compute_dtype: optional matmul-input dtype (e.g. jnp.bfloat16 on v6e/v7x);
        accumulation stays f32.  None (default) keeps everything f32 (exact).
    """
    orig_dtype = np.dtype(x.dtype)
    batch, dim_in = x.shape
    dim_hidden = params["w_in"].shape[1]
    dim_out = params["w_out"].shape[1]

    h_p = _round_up(dim_hidden, _LANE)
    dout_p = _round_up(dim_out, _LANE)    # lane-dense (unmasked) output stores

    w_dtype = np.dtype(compute_dtype) if compute_dtype is not None else np.dtype(params["w_in"].dtype)
    x_dtype = np.dtype(compute_dtype) if compute_dtype is not None else orig_dtype

    # ---- Pad weight feature dims to lane width (zero padding keeps math exact).
    # x's feature dim is left unpadded: its block spans the full dim (exempt from
    # the (8,128) rule), avoiding a wrapper-side HBM pass over x's features.
    w_in_p = _pad_axis(params["w_in"], 1, h_p).astype(w_dtype)
    b_in_p = _pad_axis(params["b_in"], 1, h_p).astype(jnp.float32)
    w_out_p = _pad_axis(_pad_axis(params["w_out"], 0, h_p), 1, dout_p).astype(w_dtype)
    b_out_p = _pad_axis(params["b_out"], 1, dout_p).astype(jnp.float32)
    if n_hidden_layers > 0:
        w_hid_p = _pad_axis(_pad_axis(params["w_hid"][:n_hidden_layers], 1, h_p),
                            2, h_p).astype(w_dtype)
        b_hid_p = _pad_axis(params["b_hid"][:n_hidden_layers], 2, h_p).astype(jnp.float32)
    else:
        w_hid_p = b_hid_p = None

    # ---- VMEM budget (generation aware: 64 MiB on v7x, 128 MiB on v5e/v6e).
    vmem_cap = _vmem_capacity_bytes()
    itemsize_x = int(x_dtype.itemsize)
    itemsize_w = int(w_dtype.itemsize)
    hid_weight_bytes = n_hidden_layers * h_p * h_p * itemsize_w
    small_weight_bytes = ((dim_in * h_p + h_p * dout_p) * itemsize_w
                          + (h_p + dout_p + n_hidden_layers * h_p) * 4)

    # ---- Batch tiling: minimize tail padding; >=2 grid steps for deep MLPs so
    # v7x's second TensorCore gets work; bigger tiles where 128 MiB VMEM allows.
    cap_rows = 1024 if vmem_cap >= 100 * 2**20 else 512
    min_tiles = 2 if (n_hidden_layers >= 2 and batch >= 2 * _SUBLANE) else 1
    n_tiles = max(_cdiv(batch, cap_rows), min_tiles)
    n_tiles = min(n_tiles, _cdiv(batch, _SUBLANE))
    tm = _round_up(_cdiv(batch, n_tiles), _SUBLANE)
    batch_p = _round_up(batch, tm)
    grid = (batch_p // tm,)

    io_bytes = 2 * tm * (dim_in * itemsize_x + dout_p * int(orig_dtype.itemsize))
    act_bytes = 6 * tm * h_p * 4   # live f32 activation working set

    # ---- Stream hidden weights per layer when the stacked block won't fit.
    streaming = bool(force_stream) and n_hidden_layers > 0
    if n_hidden_layers > 0 and not streaming:
        resident_total = hid_weight_bytes + small_weight_bytes + io_bytes + act_bytes
        streaming = resident_total > vmem_cap - 16 * 2**20

    x_c = x.astype(x_dtype) if x_dtype != orig_dtype else x
    x_p = _pad_axis(x_c, 0, batch_p)   # tail padding is < tm rows by construction

    def _run(single_buffered_weights):
        def resident(a):
            nd = a.ndim
            if single_buffered_weights:
                # Constant index_map => no "next" block ever needed; single
                # buffering halves resident weight VMEM.
                return pl.BlockSpec(a.shape, lambda i, _n=nd: (0,) * _n,
                                    pipeline_mode=pl.Buffered(1))
            return pl.BlockSpec(a.shape, lambda i, _n=nd: (0,) * _n)

        x_spec = pl.BlockSpec((tm, dim_in), lambda i: (i, 0))
        out_spec = pl.BlockSpec((tm, dout_p), lambda i: (i, 0))
        wf = 1 if single_buffered_weights else 2

        scratch_shapes = []
        if streaming:
            kernel = functools.partial(_mlp_streaming_kernel,
                                       n_hidden_layers=n_hidden_layers,
                                       leaky_relu_coef=leaky_relu_coef)
            in_specs = [x_spec, resident(w_in_p), resident(b_in_p),
                        pl.BlockSpec(memory_space=pl.ANY),   # w_hid stays in HBM
                        resident(b_hid_p), resident(w_out_p), resident(b_out_p)]
            args = (x_p, w_in_p, b_in_p, w_hid_p, b_hid_p, w_out_p, b_out_p)
            scratch_shapes = [pltpu.VMEM((2, h_p, h_p), w_dtype),
                              pltpu.SemaphoreType.DMA((2,))]
            resident_bytes = small_weight_bytes * wf + 2 * h_p * h_p * itemsize_w
        elif n_hidden_layers > 0:
            kernel = functools.partial(_mlp_resident_kernel,
                                       n_hidden_layers=n_hidden_layers,
                                       leaky_relu_coef=leaky_relu_coef)
            in_specs = [x_spec, resident(w_in_p), resident(b_in_p),
                        resident(w_hid_p), resident(b_hid_p),
                        resident(w_out_p), resident(b_out_p)]
            args = (x_p, w_in_p, b_in_p, w_hid_p, b_hid_p, w_out_p, b_out_p)
            resident_bytes = (small_weight_bytes + hid_weight_bytes) * wf
        else:
            kernel = functools.partial(_mlp_resident_kernel,
                                       n_hidden_layers=0,
                                       leaky_relu_coef=leaky_relu_coef)
            in_specs = [x_spec, resident(w_in_p), resident(b_in_p),
                        resident(w_out_p), resident(b_out_p)]
            args = (x_p, w_in_p, b_in_p, w_out_p, b_out_p)
            resident_bytes = small_weight_bytes * wf

        need = resident_bytes + io_bytes + act_bytes
        vmem_limit = int(min(vmem_cap - 8 * 2**20,                   # per-gen ceiling
                             max(32 * 2**20, int(1.5 * need) + (4 << 20))))

        return pl.pallas_call(
            kernel,
            out_shape=jax.ShapeDtypeStruct((batch_p, dout_p), orig_dtype),
            grid=grid,
            in_specs=in_specs,
            out_specs=out_spec,
            scratch_shapes=scratch_shapes,
            compiler_params=pltpu.CompilerParams(
                dimension_semantics=("parallel",),   # shard batch tiles across TCs
                vmem_limit_bytes=vmem_limit,
            ),
        )(*args)

    try:
        out_p = _run(single_buffered_weights=True)
    except Exception:
        # Fallback for runtimes that reject Buffered(1) on resident operands.
        out_p = _run(single_buffered_weights=False)

    # Strip batch tail padding and output lane padding.
    return out_p[:batch, :dim_out]


# --------------------------------------------------------------------------- #
# Params / reference
# --------------------------------------------------------------------------- #
def init_params(key, dim_input, dim_output, dim_hidden, n_hidden_layers,
                is_bias=True, dtype=jnp.float32):
    """Deterministic init mimicking nn.Linear's U(-1/sqrt(fan_in), 1/sqrt(fan_in))."""
    ks = jax.random.split(key, 6)

    def uni(k, shape, fan_in):
        bound = 1.0 / jnp.sqrt(jnp.asarray(fan_in, dtype))
        return jax.random.uniform(k, shape, dtype, -bound, bound)

    L = max(n_hidden_layers, 1)
    return {
        "w_in": uni(ks[0], (dim_input, dim_hidden), dim_input),
        "b_in": (uni(ks[1], (1, dim_hidden), dim_input)
                 if is_bias else jnp.zeros((1, dim_hidden), dtype)),
        "w_hid": uni(ks[2], (L, dim_hidden, dim_hidden), dim_hidden),
        "b_hid": (uni(ks[3], (L, 1, dim_hidden), dim_hidden)
                  if is_bias else jnp.zeros((L, 1, dim_hidden), dtype)),
        "w_out": uni(ks[4], (dim_hidden, dim_output), dim_hidden),
        "b_out": (uni(ks[5], (1, dim_output), dim_hidden)
                  if is_bias else jnp.zeros((1, dim_output), dtype)),
    }


def reference_forward(x, params, *, n_hidden_layers, leaky_relu_coef=0.15):
    """Plain-JAX reference (matches the PyTorch module semantics, f32 precision)."""
    prec = lax.Precision.HIGHEST
    h = jnp.dot(x, params["w_in"], precision=prec) + params["b_in"]
    h = jnp.where(h > 0, h, leaky_relu_coef * h)
    for l in range(n_hidden_layers):
        h = jnp.dot(h, params["w_hid"][l], precision=prec) + params["b_hid"][l]
        h = jnp.where(h > 0, h, leaky_relu_coef * h)
    return jnp.dot(h, params["w_out"], precision=prec) + params["b_out"]


if __name__ == "__main__":
    key = jax.random.PRNGKey(0)
    leaky = 0.15

    cases = [
        # (name, batch, dim_input, dim_hidden, dim_output, n_hidden_layers, force_stream)
        ("base",        8, 16, 32, 4,  2, False),   # resident, statically unrolled
        ("no_hidden",   8, 16, 32, 4,  0, False),   # degenerate: no hidden layers passed
        ("deep_tiled", 24, 16, 32, 4, 10, False),   # fori path, 2 batch tiles + tail pad
        ("streamed",    8, 16, 32, 4,  2, True),    # manual per-layer weight DMA path
    ]

    for idx, (name, batch, din, dh, dout, nl, force_stream) in enumerate(cases):
        kx, kp = jax.random.split(jax.random.fold_in(key, idx))
        x = jax.random.normal(kx, (batch, din), jnp.float32)
        params = init_params(kp, din, dout, dh, nl)

        out = model_perceptron_forward(
            x, params, n_hidden_layers=nl, leaky_relu_coef=leaky,
            force_stream=force_stream)
        out = jax.block_until_ready(out)

        ref = reference_forward(x, params, n_hidden_layers=nl, leaky_relu_coef=leaky)
        assert out.shape == (batch, dout), f"{name}: bad shape {out.shape}"
        assert jnp.allclose(out, ref, atol=1e-4, rtol=1e-4), f"{name}: mismatch vs reference"

    print("KERNEL_OK")
</pallas_src>

<mosaic_0001>
module attributes {stable_mosaic.version = 11 : i64} {
  func.func @_mlp_resident_kernel(%arg0: i32, %arg1: memref<8x16xf32, #tpu.memory_space<vmem>>, %arg2: memref<16x128xf32, #tpu.memory_space<vmem>>, %arg3: memref<1x128xf32, #tpu.memory_space<vmem>>, %arg4: memref<2x128x128xf32, #tpu.memory_space<vmem>>, %arg5: memref<2x1x128xf32, #tpu.memory_space<vmem>>, %arg6: memref<128x128xf32, #tpu.memory_space<vmem>>, %arg7: memref<1x128xf32, #tpu.memory_space<vmem>>, %arg8: memref<8x128xf32, #tpu.memory_space<vmem>>) attributes {dimension_semantics = [#tpu.dimension_semantics<parallel>], iteration_bounds = array<i64: 1>, scalar_prefetch = 0 : i64, scratch_operands = 0 : i64, tpu.core_type = #tpu.core_type<tc>, window_params = [{transform_indices = @transform_0, window_bounds = array<i64: 8, 16>}, {pipeline_mode = #tpu.pipeline_mode<synchronous>, transform_indices = @transform_1, window_bounds = array<i64: 16, 128>}, {pipeline_mode = #tpu.pipeline_mode<synchronous>, transform_indices = @transform_2, window_bounds = array<i64: 1, 128>}, {pipeline_mode = #tpu.pipeline_mode<synchronous>, transform_indices = @transform_3, window_bounds = array<i64: 2, 128, 128>}, {pipeline_mode = #tpu.pipeline_mode<synchronous>, transform_indices = @transform_4, window_bounds = array<i64: 2, 1, 128>}, {pipeline_mode = #tpu.pipeline_mode<synchronous>, transform_indices = @transform_5, window_bounds = array<i64: 128, 128>}, {pipeline_mode = #tpu.pipeline_mode<synchronous>, transform_indices = @transform_6, window_bounds = array<i64: 1, 128>}, {transform_indices = @transform_7, window_bounds = array<i64: 8, 128>}]} {
    %c0 = arith.constant 0 : index
    %c0_0 = arith.constant 0 : index
    %0 = vector.load %arg1[%c0, %c0_0] : memref<8x16xf32, #tpu.memory_space<vmem>>, vector<8x16xf32>
    %c0_1 = arith.constant 0 : index
    %c0_2 = arith.constant 0 : index
    %1 = vector.load %arg2[%c0_1, %c0_2] : memref<16x128xf32, #tpu.memory_space<vmem>>, vector<16x128xf32>
    %cst = arith.constant dense<0.000000e+00> : vector<8x128xf32>
    %2 = tpu.matmul %0, %1, %cst {dimension_numbers = #tpu.dot_dimension_numbers<[1], [0], [0], [1], [0, 0, 1, 1], [], []>} : vector<8x16xf32>, vector<16x128xf32>, vector<8x128xf32> -> vector<8x128xf32>
    %c0_3 = arith.constant 0 : index
    %c0_4 = arith.constant 0 : index
    %3 = vector.load %arg3[%c0_3, %c0_4] : memref<1x128xf32, #tpu.memory_space<vmem>>, vector<1x128xf32>
    %4 = vector.broadcast %3 : vector<1x128xf32> to vector<8x128xf32>
    %5 = arith.addf %2, %4 : vector<8x128xf32>
    %cst_5 = arith.constant 1.500000e-01 : f32
    %6 = vector.broadcast %cst_5 : f32 to vector<8x128xf32>
    %7 = arith.mulf %6, %5 : vector<8x128xf32>
    %8 = arith.maximumf %5, %7 : vector<8x128xf32>
    %c0_6 = arith.constant 0 : index
    %c0_7 = arith.constant 0 : index
    %c0_8 = arith.constant 0 : index
    %9 = vector.load %arg4[%c0_6, %c0_7, %c0_8] : memref<2x128x128xf32, #tpu.memory_space<vmem>>, vector<1x128x128xf32>
    %10 = vector.shape_cast %9 : vector<1x128x128xf32> to vector<128x128xf32>
    %cst_9 = arith.constant dense<0.000000e+00> : vector<8x128xf32>
    %11 = tpu.matmul %8, %10, %cst_9 {dimension_numbers = #tpu.dot_dimension_numbers<[1], [0], [0], [1], [0, 0, 1, 1], [], []>} : vector<8x128xf32>, vector<128x128xf32>, vector<8x128xf32> -> vector<8x128xf32>
    %c0_10 = arith.constant 0 : index
    %c0_11 = arith.constant 0 : index
    %c0_12 = arith.constant 0 : index
    %12 = vector.load %arg5[%c0_10, %c0_11, %c0_12] : memref<2x1x128xf32, #tpu.memory_space<vmem>>, vector<1x1x128xf32>
    %13 = vector.shape_cast %12 : vector<1x1x128xf32> to vector<1x128xf32>
    %14 = vector.broadcast %13 : vector<1x128xf32> to vector<8x128xf32>
    %15 = arith.addf %11, %14 : vector<8x128xf32>
    %cst_13 = arith.constant 1.500000e-01 : f32
    %16 = vector.broadcast %cst_13 : f32 to vector<8x128xf32>
    %17 = arith.mulf %16, %15 : vector<8x128xf32>
    %18 = arith.maximumf %15, %17 : vector<8x128xf32>
    %c1 = arith.constant 1 : index
    %c0_14 = arith.constant 0 : index
    %c0_15 = arith.constant 0 : index
    %19 = vector.load %arg4[%c1, %c0_14, %c0_15] : memref<2x128x128xf32, #tpu.memory_space<vmem>>, vector<1x128x128xf32>
    %20 = vector.shape_cast %19 : vector<1x128x128xf32> to vector<128x128xf32>
    %cst_16 = arith.constant dense<0.000000e+00> : vector<8x128xf32>
    %21 = tpu.matmul %18, %20, %cst_16 {dimension_numbers = #tpu.dot_dimension_numbers<[1], [0], [0], [1], [0, 0, 1, 1], [], []>} : vector<8x128xf32>, vector<128x128xf32>, vector<8x128xf32> -> vector<8x128xf32>
    %c1_17 = arith.constant 1 : index
    %c0_18 = arith.constant 0 : index
    %c0_19 = arith.constant 0 : index
    %22 = vector.load %arg5[%c1_17, %c0_18, %c0_19] : memref<2x1x128xf32, #tpu.memory_space<vmem>>, vector<1x1x128xf32>
    %23 = vector.shape_cast %22 : vector<1x1x128xf32> to vector<1x128xf32>
    %24 = vector.broadcast %23 : vector<1x128xf32> to vector<8x128xf32>
    %25 = arith.addf %21, %24 : vector<8x128xf32>
    %cst_20 = arith.constant 1.500000e-01 : f32
    %26 = vector.broadcast %cst_20 : f32 to vector<8x128xf32>
    %27 = arith.mulf %26, %25 : vector<8x128xf32>
    %28 = arith.maximumf %25, %27 : vector<8x128xf32>
    %c0_21 = arith.constant 0 : index
    %c0_22 = arith.constant 0 : index
    %29 = vector.load %arg6[%c0_21, %c0_22] : memref<128x128xf32, #tpu.memory_space<vmem>>, vector<128x128xf32>
    %cst_23 = arith.constant dense<0.000000e+00> : vector<8x128xf32>
    %30 = tpu.matmul %28, %29, %cst_23 {dimension_numbers = #tpu.dot_dimension_numbers<[1], [0], [0], [1], [0, 0, 1, 1], [], []>} : vector<8x128xf32>, vector<128x128xf32>, vector<8x128xf32> -> vector<8x128xf32>
    %c0_24 = arith.constant 0 : index
    %c0_25 = arith.constant 0 : index
    %31 = vector.load %arg7[%c0_24, %c0_25] : memref<1x128xf32, #tpu.memory_space<vmem>>, vector<1x128xf32>
    %32 = vector.broadcast %31 : vector<1x128xf32> to vector<8x128xf32>
    %33 = arith.addf %30, %32 : vector<8x128xf32>
    %c0_26 = arith.constant 0 : index
    %c0_27 = arith.constant 0 : index
    %34 = vector.load %arg8[%c0_26, %c0_27] : memref<8x128xf32, #tpu.memory_space<vmem>>, vector<8x128xf32>
    tpu.vector_store %arg8[%c0_26, %c0_27], %33 {strides = array<i32>} : memref<8x128xf32, #tpu.memory_space<vmem>>, vector<8x128xf32>,
    return
  }
  func.func @transform_0(%arg0: i32) -> (i32, i32) {
    %c0_i32 = arith.constant 0 : i32
    %c0_i32_0 = arith.constant 0 : i32
    return %arg0, %c0_i32 : i32, i32
  }
  func.func @transform_1(%arg0: i32) -> (i32, i32) {
    %c0_i32 = arith.constant 0 : i32
    %c0_i32_0 = arith.constant 0 : i32
    %c0_i32_1 = arith.constant 0 : i32
    return %c0_i32, %c0_i32_0 : i32, i32
  }
  func.func @transform_2(%arg0: i32) -> (i32, i32) {
    %c0_i32 = arith.constant 0 : i32
    %c0_i32_0 = arith.constant 0 : i32
    %c0_i32_1 = arith.constant 0 : i32
    return %c0_i32, %c0_i32_0 : i32, i32
  }
  func.func @transform_3(%arg0: i32) -> (i32, i32, i32) {
    %c0_i32 = arith.constant 0 : i32
    %c0_i32_0 = arith.constant 0 : i32
    %c0_i32_1 = arith.constant 0 : i32
    %c0_i32_2 = arith.constant 0 : i32
    return %c0_i32, %c0_i32_0, %c0_i32_1 : i32, i32, i32
  }
  func.func @transform_4(%arg0: i32) -> (i32, i32, i32) {
    %c0_i32 = arith.constant 0 : i32
    %c0_i32_0 = arith.constant 0 : i32
    %c0_i32_1 = arith.constant 0 : i32
    %c0_i32_2 = arith.constant 0 : i32
    return %c0_i32, %c0_i32_0, %c0_i32_1 : i32, i32, i32
  }
  func.func @transform_5(%arg0: i32) -> (i32, i32) {
    %c0_i32 = arith.constant 0 : i32
    %c0_i32_0 = arith.constant 0 : i32
    %c0_i32_1 = arith.constant 0 : i32
    return %c0_i32, %c0_i32_0 : i32, i32
  }
  func.func @transform_6(%arg0: i32) -> (i32, i32) {
    %c0_i32 = arith.constant 0 : i32
    %c0_i32_0 = arith.constant 0 : i32
    %c0_i32_1 = arith.constant 0 : i32
    return %c0_i32, %c0_i32_0 : i32, i32
  }
  func.func @transform_7(%arg0: i32) -> (i32, i32) {
    %c0_i32 = arith.constant 0 : i32
    %c0_i32_0 = arith.constant 0 : i32
    return %arg0, %c0_i32 : i32, i32
  }
}

module attributes {stable_mosaic.version = 11 : i64} {
  func.func @_mlp_resident_kernel(%arg0: i32, %arg1: memref<8x16xf32, #tpu.memory_space<vmem>>, %arg2: memref<16x128xf32, #tpu.memory_space<vmem>>, %arg3: memref<1x128xf32, #tpu.memory_space<vmem>>, %arg4: memref<2x128x128xf32, #tpu.memory_space<vmem>>, %arg5: memref<2x1x128xf32, #tpu.memory_space<vmem>>, %arg6: memref<128x128xf32, #tpu.memory_space<vmem>>, %arg7: memref<1x128xf32, #tpu.memory_space<vmem>>, %arg8: memref<8x128xf32, #tpu.memory_space<vmem>>) attributes {dimension_semantics = [#tpu.dimension_semantics<parallel>], iteration_bounds = array<i64: 1>, scalar_prefetch = 0 : i64, scratch_operands = 0 : i64, tpu.core_type = #tpu.core_type<tc>, window_params = [{transform_indices = @transform_0, window_bounds = array<i64: 8, 16>}, {pipeline_mode = #tpu.pipeline_mode<synchronous>, transform_indices = @transform_1, window_bounds = array<i64: 16, 128>}, {pipeline_mode = #tpu.pipeline_mode<synchronous>, transform_indices = @transform_2, window_bounds = array<i64: 1, 128>}, {pipeline_mode = #tpu.pipeline_mode<synchronous>, transform_indices = @transform_3, window_bounds = array<i64: 2, 128, 128>}, {pipeline_mode = #tpu.pipeline_mode<synchronous>, transform_indices = @transform_4, window_bounds = array<i64: 2, 1, 128>}, {pipeline_mode = #tpu.pipeline_mode<synchronous>, transform_indices = @transform_5, window_bounds = array<i64: 128, 128>}, {pipeline_mode = #tpu.pipeline_mode<synchronous>, transform_indices = @transform_6, window_bounds = array<i64: 1, 128>}, {transform_indices = @transform_7, window_bounds = array<i64: 8, 128>}]} {
    %c0 = arith.constant 0 : index
    %c0_0 = arith.constant 0 : index
    %0 = vector.load %arg1[%c0, %c0_0] : memref<8x16xf32, #tpu.memory_space<vmem>>, vector<8x16xf32>
    %c0_1 = arith.constant 0 : index
    %c0_2 = arith.constant 0 : index
    %1 = vector.load %arg2[%c0_1, %c0_2] : memref<16x128xf32, #tpu.memory_space<vmem>>, vector<16x128xf32>
    %cst = arith.constant dense<0.000000e+00> : vector<8x128xf32>
    %2 = tpu.matmul %0, %1, %cst {dimension_numbers = #tpu.dot_dimension_numbers<[1], [0], [0], [1], [0, 0, 1, 1], [], []>} : vector<8x16xf32>, vector<16x128xf32>, vector<8x128xf32> -> vector<8x128xf32>
    %c0_3 = arith.constant 0 : index
    %c0_4 = arith.constant 0 : index
    %3 = vector.load %arg3[%c0_3, %c0_4] : memref<1x128xf32, #tpu.memory_space<vmem>>, vector<1x128xf32>
    %4 = vector.broadcast %3 : vector<1x128xf32> to vector<8x128xf32>
    %5 = arith.addf %2, %4 : vector<8x128xf32>
    %cst_5 = arith.constant 1.500000e-01 : f32
    %6 = vector.broadcast %cst_5 : f32 to vector<8x128xf32>
    %7 = arith.mulf %6, %5 : vector<8x128xf32>
    %8 = arith.maximumf %5, %7 : vector<8x128xf32>
    %c0_6 = arith.constant 0 : index
    %c0_7 = arith.constant 0 : index
    %c0_8 = arith.constant 0 : index
    %9 = vector.load %arg4[%c0_6, %c0_7, %c0_8] : memref<2x128x128xf32, #tpu.memory_space<vmem>>, vector<1x128x128xf32>
    %10 = vector.shape_cast %9 : vector<1x128x128xf32> to vector<128x128xf32>
    %cst_9 = arith.constant dense<0.000000e+00> : vector<8x128xf32>
    %11 = tpu.matmul %8, %10, %cst_9 {dimension_numbers = #tpu.dot_dimension_numbers<[1], [0], [0], [1], [0, 0, 1, 1], [], []>} : vector<8x128xf32>, vector<128x128xf32>, vector<8x128xf32> -> vector<8x128xf32>
    %c0_10 = arith.constant 0 : index
    %c0_11 = arith.constant 0 : index
    %c0_12 = arith.constant 0 : index
    %12 = vector.load %arg5[%c0_10, %c0_11, %c0_12] : memref<2x1x128xf32, #tpu.memory_space<vmem>>, vector<1x1x128xf32>
    %13 = vector.shape_cast %12 : vector<1x1x128xf32> to vector<1x128xf32>
    %14 = vector.broadcast %13 : vector<1x128xf32> to vector<8x128xf32>
    %15 = arith.addf %11, %14 : vector<8x128xf32>
    %cst_13 = arith.constant 1.500000e-01 : f32
    %16 = vector.broadcast %cst_13 : f32 to vector<8x128xf32>
    %17 = arith.mulf %16, %15 : vector<8x128xf32>
    %18 = arith.maximumf %15, %17 : vector<8x128xf32>
    %c1 = arith.constant 1 : index
    %c0_14 = arith.constant 0 : index
    %c0_15 = arith.constant 0 : index
    %19 = vector.load %arg4[%c1, %c0_14, %c0_15] : memref<2x128x128xf32, #tpu.memory_space<vmem>>, vector<1x128x128xf32>
    %20 = vector.shape_cast %19 : vector<1x128x128xf32> to vector<128x128xf32>
    %cst_16 = arith.constant dense<0.000000e+00> : vector<8x128xf32>
    %21 = tpu.matmul %18, %20, %cst_16 {dimension_numbers = #tpu.dot_dimension_numbers<[1], [0], [0], [1], [0, 0, 1, 1], [], []>} : vector<8x128xf32>, vector<128x128xf32>, vector<8x128xf32> -> vector<8x128xf32>
    %c1_17 = arith.constant 1 : index
    %c0_18 = arith.constant 0 : index
    %c0_19 = arith.constant 0 : index
    %22 = vector.load %arg5[%c1_17, %c0_18, %c0_19] : memref<2x1x128xf32, #tpu.memory_space<vmem>>, vector<1x1x128xf32>
    %23 = vector.shape_cast %22 : vector<1x1x128xf32> to vector<1x128xf32>
    %24 = vector.broadcast %23 : vector<1x128xf32> to vector<8x128xf32>
    %25 = arith.addf %21, %24 : vector<8x128xf32>
    %cst_20 = arith.constant 1.500000e-01 : f32
    %26 = vector.broadcast %cst_20 : f32 to vector<8x128xf32>
    %27 = arith.mulf %26, %25 : vector<8x128xf32>
    %28 = arith.maximumf %25, %27 : vector<8x128xf32>
    %c0_21 = arith.constant 0 : index
    %c0_22 = arith.constant 0 : index
    %29 = vector.load %arg6[%c0_21, %c0_22] : memref<128x128xf32, #tpu.memory_space<vmem>>, vector<128x128xf32>
    %cst_23 = arith.constant dense<0.000000e+00> : vector<8x128xf32>
    %30 = tpu.matmul %28, %29, %cst_23 {dimension_numbers = #tpu.dot_dimension_numbers<[1], [0], [0], [1], [0, 0, 1, 1], [], []>} : vector<8x128xf32>, vector<128x128xf32>, vector<8x128xf32> -> vector<8x128xf32>
    %c0_24 = arith.constant 0 : index
    %c0_25 = arith.constant 0 : index
    %31 = vector.load %arg7[%c0_24, %c0_25] : memref<1x128xf32, #tpu.memory_space<vmem>>, vector<1x128xf32>
    %32 = vector.broadcast %31 : vector<1x128xf32> to vector<8x128xf32>
    %33 = arith.addf %30, %32 : vector<8x128xf32>
    %c0_26 = arith.constant 0 : index
    %c0_27 = arith.constant 0 : index
    %34 = vector.load %arg8[%c0_26, %c0_27] : memref<8x128xf32, #tpu.memory_space<vmem>>, vector<8x128xf32>
    tpu.vector_store %arg8[%c0_26, %c0_27], %33 {strides = array<i32>} : memref<8x128xf32, #tpu.memory_space<vmem>>, vector<8x128xf32>,
    return
  }
  func.func @transform_0(%arg0: i32) -> (i32, i32) {
    %c0_i32 = arith.constant 0 : i32
    %c0_i32_0 = arith.constant 0 : i32
    return %arg0, %c0_i32 : i32, i32
  }
  func.func @transform_1(%arg0: i32) -> (i32, i32) {
    %c0_i32 = arith.constant 0 : i32
    %c0_i32_0 = arith.constant 0 : i32
    %c0_i32_1 = arith.constant 0 : i32
    return %c0_i32, %c0_i32_0 : i32, i32
  }
  func.func @transform_2(%arg0: i32) -> (i32, i32) {
    %c0_i32 = arith.constant 0 : i32
    %c0_i32_0 = arith.constant 0 : i32
    %c0_i32_1 = arith.constant 0 : i32
    return %c0_i32, %c0_i32_0 : i32, i32
  }
  func.func @transform_3(%arg0: i32) -> (i32, i32, i32) {
    %c0_i32 = arith.constant 0 : i32
    %c0_i32_0 = arith.constant 0 : i32
    %c0_i32_1 = arith.constant 0 : i32
    %c0_i32_2 = arith.constant 0 : i32
    return %c0_i32, %c0_i32_0, %c0_i32_1 : i32, i32, i32
  }
  func.func @transform_4(%arg0: i32) -> (i32, i32, i32) {
    %c0_i32 = arith.constant 0 : i32
    %c0_i32_0 = arith.constant 0 : i32
    %c0_i32_1 = arith.constant 0 : i32
    %c0_i32_2 = arith.constant 0 : i32
    return %c0_i32, %c0_i32_0, %c0_i32_1 : i32, i32, i32
  }
  func.func @transform_5(%arg0: i32) -> (i32, i32) {
    %c0_i32 = arith.constant 0 : i32
    %c0_i32_0 = arith.constant 0 : i32
    %c0_i32_1 = arith.constant 0 : i32
    return %c0_i32, %c0_i32_0 : i32, i32
  }
  func.func @transform_6(%arg0: i32) -> (i32, i32) {
    %c0_i32 = arith.constant 0 : i32
    %c0_i32_0 = arith.constant 0 : i32
    %c0_i32_1 = arith.constant 0 : i32
    return %c0_i32, %c0_i32_0 : i32, i32
  }
  func.func @transform_7(%arg0: i32) -> (i32, i32) {
    %c0_i32 = arith.constant 0 : i32
    %c0_i32_0 = arith.constant 0 : i32
    return %arg0, %c0_i32 : i32, i32
  }
}

</mosaic_0001>

<llo_original>
// kernel: tpu_custom_call.1
$region0: #{tpu_custom_call.1}
  #allocation0 [shape = 'u32[]', space=smem, size = 0x4, offset = 0x4, fixed_abs, tag = 'smem constant byte address 0x4 - core index']
  #allocation1 [shape = 'u32[144,128]{1,0:T(1,128)}', space=vmem, size = 0x12000, scoped, tag = 'internal scratch']
  %s0 = inlined_call_operand.hbm [shape: f32[8,16], index: 0, kind: input, shape index: {}]
  %s1 = inlined_call_operand.hbm [shape: f32[16,128], index: 1, kind: input, shape index: {}]
  %s2 = inlined_call_operand.vmem [shape: f32[1,128], index: 2, kind: input, shape index: {}]
  %s3 = inlined_call_operand.hbm [shape: f32[2,128,128], index: 3, kind: input, shape index: {}]
  %s4 = inlined_call_operand.vmem [shape: f32[2,1,128], index: 4, kind: input, shape index: {}]
  %s5 = inlined_call_operand.hbm [shape: f32[128,128], index: 5, kind: input, shape index: {}]
  %s6 = inlined_call_operand.vmem [shape: f32[1,128], index: 6, kind: input, shape index: {}]
  %s7 = inlined_call_operand.hbm [shape: f32[8,128], index: 7, kind: output, shape index: {}]
  %s8 = sld [smem:[#allocation0]]
  $region54: #{tpu_custom_call.1} parent=0
    _
  %s10 = ssub.s32 1, %s8
  %s11 = scalar_select 0, %s10, %s8
  $region1: #{tpu_custom_call.1} parent=0
    #allocation2 [shape = 'u8[4096]{0}', space=vmem, size = 0x1000, scoped, tag = 'input window, operand 0, single buffered']
    #allocation3 [shape = 's32[1]{0}', space=sflag, size = 0x4, scoped, tag = 'scoped memory for tpu_custom_call.1']
    #allocation4 [shape = 's32[1]{0}', space=sflag, size = 0x4, scoped, tag = 'scoped memory for tpu_custom_call.1']
    #allocation5 [shape = 'u8[8192]{0}', space=vmem, size = 0x2000, scoped, tag = 'input window, operand 1, single buffered']
    #allocation6 [shape = 's32[1]{0}', space=sflag, size = 0x4, scoped, tag = 'scoped memory for tpu_custom_call.1']
    #allocation7 [shape = 'u8[131072]{0}', space=vmem, size = 0x20000, scoped, tag = 'input window, operand 3, single buffered']
    #allocation8 [shape = 'u8[65536]{0}', space=vmem, size = 0x10000, scoped, tag = 'input window, operand 5, single buffered']
    #allocation9 [shape = 's32[1]{0}', space=sflag, size = 0x4, scoped, tag = 'scoped memory for tpu_custom_call.1']
    #allocation10 [shape = 'u8[4096]{0}', space=vmem, size = 0x1000, scoped, tag = 'output window, operand 0, single buffered']
    %12 = vsyncpa [#allocation3], 0
    %13 = vsyncpa [#allocation6], 0
    %14 = vsyncpa [#allocation9], 0
    %15 = vsyncpa [#allocation4], 0
    // Predicated region
    $region2: #{tpu_custom_call.1} parent=1 // pred_check
      _
    $region3: #{tpu_custom_call.1} parent=1 // pred_check_branch
      %17 = sbr.rel (0) target = $region5
    $region4: #{tpu_custom_call.1} parent=1 // pred_region
      %s19 = ssub.s32 128, 128
      %20 = vsyncadd [#allocation3], %s19
      %s22 = sshll.u32 [#allocation2], 4
      %s23 = int_to_ptr.vmem [resolvable:$true] %s22
      %25 = dma.hbm_to_vmem [thread:$0]  %s0, 128, %s23, [#allocation3]
    $region5: #{tpu_custom_call.1} parent=1 // pred_fallthru
      _
    // Predicated region
    $region6: #{tpu_custom_call.1} parent=1 // pred_check
      _
    $region7: #{tpu_custom_call.1} parent=1 // pred_check_branch
      %27 = sbr.rel (0) target = $region9
    $region8: #{tpu_custom_call.1} parent=1 // pred_region
      %s29 = ssub.s32 256, 256
      %30 = vsyncadd [#allocation6], %s29
      %s31 = sshll.u32 [#allocation5], 4
      %s32 = int_to_ptr.vmem [resolvable:$true] %s31
      %37 = dma.hbm_to_vmem [thread:$0]  %s1, 256, %s32, [#allocation6], 128, 128, 8
    $region9: #{tpu_custom_call.1} parent=1 // pred_fallthru
      _
    // Predicated region
    $region10: #{tpu_custom_call.1} parent=1 // pred_check
      _
    $region11: #{tpu_custom_call.1} parent=1 // pred_check_branch
      %39 = sbr.rel (0) target = $region13
    $region12: #{tpu_custom_call.1} parent=1 // pred_region
      _
    $region13: #{tpu_custom_call.1} parent=1 // pred_fallthru
      _
    // Predicated region
    $region14: #{tpu_custom_call.1} parent=1 // pred_check
      _
    $region15: #{tpu_custom_call.1} parent=1 // pred_check_branch
      %41 = sbr.rel (0) target = $region17
    $region16: #{tpu_custom_call.1} parent=1 // pred_region
      %s43 = ssub.s32 4096, 4096
      %44 = vsyncadd [#allocation6], %s43
      %s45 = sshll.u32 [#allocation7], 4
      %s46 = int_to_ptr.vmem [resolvable:$true] %s45
      %51 = dma.hbm_to_vmem [thread:$0]  %s3, 4096, %s46, [#allocation6], 128, 128, 8
    $region17: #{tpu_custom_call.1} parent=1 // pred_fallthru
      _
    // Predicated region
    $region18: #{tpu_custom_call.1} parent=1 // pred_check
      _
    $region19: #{tpu_custom_call.1} parent=1 // pred_check_branch
      %53 = sbr.rel (0) target = $region21
    $region20: #{tpu_custom_call.1} parent=1 // pred_region
      _
    $region21: #{tpu_custom_call.1} parent=1 // pred_fallthru
      _
    // Predicated region
    $region22: #{tpu_custom_call.1} parent=1 // pred_check
      _
    $region23: #{tpu_custom_call.1} parent=1 // pred_check_branch
      %55 = sbr.rel (0) target = $region25
    $region24: #{tpu_custom_call.1} parent=1 // pred_region
      %s57 = ssub.s32 2048, 2048
      %58 = vsyncadd [#allocation9], %s57
      %s59 = sshll.u32 [#allocation8], 4
      %s60 = int_to_ptr.vmem [resolvable:$true] %s59
      %65 = dma.hbm_to_vmem [thread:$0]  %s5, 2048, %s60, [#allocation9], 128, 128, 8
    $region25: #{tpu_custom_call.1} parent=1 // pred_fallthru
      _
    // Predicated region
    $region26: #{tpu_custom_call.1} parent=1 // pred_check
      _
    $region27: #{tpu_custom_call.1} parent=1 // pred_check_branch
      %67 = sbr.rel (0) target = $region29
    $region28: #{tpu_custom_call.1} parent=1 // pred_region
      _
    $region29: #{tpu_custom_call.1} parent=1 // pred_fallthru
      _
    // Predicated region
    $region30: #{tpu_custom_call.1} parent=1 // pred_check
      _
    $region31: #{tpu_custom_call.1} parent=1 // pred_check_branch
      %69 = sbr.rel (0) target = $region33
    $region32: #{tpu_custom_call.1} parent=1 // pred_region
      %70 = dma.done [#allocation3], 128
    $region33: #{tpu_custom_call.1} parent=1 // pred_fallthru
      _
    // Predicated region
    $region34: #{tpu_custom_call.1} parent=1 // pred_check
      _
    $region35: #{tpu_custom_call.1} parent=1 // pred_check_branch
      %72 = sbr.rel (0) target = $region37
    $region36: #{tpu_custom_call.1} parent=1 // pred_region
      %73 = dma.done [#allocation6], 256
    $region37: #{tpu_custom_call.1} parent=1 // pred_fallthru
      _
    // Predicated region
    $region38: #{tpu_custom_call.1} parent=1 // pred_check
      _
    $region39: #{tpu_custom_call.1} parent=1 // pred_check_branch
      %75 = sbr.rel (0) target = $region41
    $region40: #{tpu_custom_call.1} parent=1 // pred_region
      %76 = dma.done [#allocation6], 4096
    $region41: #{tpu_custom_call.1} parent=1 // pred_fallthru
      _
    // Predicated region
    $region42: #{tpu_custom_call.1} parent=1 // pred_check
      _
    $region43: #{tpu_custom_call.1} parent=1 // pred_check_branch
      %78 = sbr.rel (0) target = $region45
    $region44: #{tpu_custom_call.1} parent=1 // pred_region
      %79 = dma.done [#allocation9], 2048
    $region45: #{tpu_custom_call.1} parent=1 // pred_fallthru
      _
    %v80 = vld [vmem:[#allocation2] sm:$0xff]
    %v81 = vld [vmem:[#allocation5] sm:$0xff]
    %v82 = vld [vmem:[#allocation5 + $0x8] sm:$0xff]
    %v83 = vld [vmem:[%s2] sm:$0x1]
    %v85 = vlaneseq
    %v86 = vshrl.u32 %v85, 7
    %v87 = vsub.s32 0, %v86
    %v88 = vrot.slane %v83, %v87
    %vm90 = vcmask 130048
    %v92 = vsel %vm90, %v80, 0
    %94 = vmatprep.subr.mxu0 0.0
    %95 = vmatpush1.msra.mxu0 0.0
    %96 = vmatprep.subr.mxu0 0.0
    %97 = vmatpush1.msra.mxu0 0.0
    %98 = vmatprep.subr.mxu0 0.0
    %99 = vmatpush1.msra.mxu0 0.0
    %100 = vmatprep.subr.mxu0 0.0
    %101 = vmatpush1.msra.mxu0 0.0
    %102 = vmatprep.subr.mxu0 0.0
    %103 = vmatpush1.msra.mxu0 0.0
    %104 = vmatprep.subr.mxu0 0.0
    %105 = vmatpush1.msra.mxu0 0.0
    %106 = vmatprep.subr.mxu0 0.0
    %107 = vmatpush1.msra.mxu0 0.0
    %108 = vmatprep.subr.mxu0 0.0
    %109 = vmatpush1.msra.mxu0 0.0
    %110 = vmatprep.subr.mxu0 0.0
    %111 = vmatpush1.msra.mxu0 0.0
    %112 = vmatprep.subr.mxu0 0.0
    %113 = vmatpush1.msra.mxu0 0.0
    %114 = vmatprep.subr.mxu0 0.0
    %115 = vmatpush1.msra.mxu0 0.0
    %116 = vmatprep.subr.mxu0 0.0
    %117 = vmatpush1.msra.mxu0 0.0
    %118 = vmatprep.subr.mxu0 0.0
    %119 = vmatpush1.msra.mxu0 0.0
    %120 = vmatprep.subr.mxu0 0.0
    %121 = vmatpush1.msra.mxu0 0.0
    %122 = vmatprep.subr.mxu0 0.0
    %123 = vmatpush1.msra.mxu0 %v82
    %124 = vmatprep.subr.mxu0 0.0
    %125 = vmatpush1.msra.mxu0 %v81
    %126 = vmatprep.subr.mxu0 0.0
    %127 = vmatpush2.msra.mxu0 0.0
    %128 = vmatprep.subr.mxu0 0.0
    %129 = vmatpush2.msra.mxu0 0.0
    %130 = vmatprep.subr.mxu0 0.0
    %131 = vmatpush2.msra.mxu0 0.0
    %132 = vmatprep.subr.mxu0 0.0
    %133 = vmatpush2.msra.mxu0 0.0
    %134 = vmatprep.subr.mxu0 0.0
    %135 = vmatpush2.msra.mxu0 0.0
    %136 = vmatprep.subr.mxu0 0.0
    %137 = vmatpush2.msra.mxu0 0.0
    %138 = vmatprep.subr.mxu0 0.0
    %139 = vmatpush2.msra.mxu0 0.0
    %140 = vmatprep.subr.mxu0 0.0
    %141 = vmatpush2.msra.mxu0 0.0
    %142 = vmatprep.subr.mxu0 0.0
    %143 = vmatpush2.msra.mxu0 0.0
    %144 = vmatprep.subr.mxu0 0.0
    %145 = vmatpush2.msra.mxu0 0.0
    %146 = vmatprep.subr.mxu0 0.0
    %147 = vmatpush2.msra.mxu0 0.0
    %148 = vmatprep.subr.mxu0 0.0
    %149 = vmatpush2.msra.mxu0 0.0
    %150 = vmatprep.subr.mxu0 0.0
    %151 = vmatpush2.msra.mxu0 0.0
    %152 = vmatprep.subr.mxu0 0.0
    %153 = vmatpush2.msra.mxu0 0.0
    %154 = vmatprep.subr.mxu0 0.0
    %155 = vmatpush2.msra.mxu0 0.0
    %156 = vmatprep.subr.mxu0 0.0
    %157 = vmatpush2.msra.mxu0 0.0
    %158 = vmatprep.mubr.f32.mxu0 0.0
    %159 = vmatmul.mubr.f32.gmra.mxu0 %v92
    %v160 = vpop.f32.mrf.mxu0
    %v161 = vadd.f32 %v88, %v160
    %v162 = vpop.f32.mrf.mxu0
    %163 = vdwg.mxu0
    %v164 = vmul.f32 %v161, 0.15
    %v165 = vmax.f32 %v161, %v164
    %v166 = vld [vmem:[#allocation7] sm:$0xff]
    %v167 = vld [vmem:[#allocation7 + $0x8] sm:$0xff]
    %v168 = vld [vmem:[#allocation7 + $0x10] sm:$0xff]
    %v169 = vld [vmem:[#allocation7 + $0x18] sm:$0xff]
    %v170 = vld [vmem:[#allocation7 + $0x20] sm:$0xff]
    %v171 = vld [vmem:[#allocation7 + $0x28] sm:$0xff]
    %v172 = vld [vmem:[#allocation7 + $0x30] sm:$0xff]
    %v173 = vld [vmem:[#allocation7 + $0x38] sm:$0xff]
    %v174 = vld [vmem:[#allocation7 + $0x40] sm:$0xff]
    %v175 = vld [vmem:[#allocation7 + $0x48] sm:$0xff]
    %v176 = vld [vmem:[#allocation7 + $0x50] sm:$0xff]
    %v177 = vld [vmem:[#allocation7 + $0x58] sm:$0xff]
    %v178 = vld [vmem:[#allocation7 + $0x60] sm:$0xff]
    %v179 = vld [vmem:[#allocation7 + $0x68] sm:$0xff]
    %v180 = vld [vmem:[#allocation7 + $0x70] sm:$0xff]
    %v181 = vld [vmem:[#allocation7 + $0x78] sm:$0xff]
    %v182 = vld [vmem:[%s4] sm:$0x1]
    %v184 = vlaneseq
    %v185 = vshrl.u32 %v184, 7
    %v186 = vsub.s32 0, %v185
    %v187 = vrot.slane %v182, %v186
    %189 = vmatprep.subr.mxu0 0.0
    %190 = vmatpush1.msra.mxu0 %v181
    %191 = vmatprep.subr.mxu0 0.0
    %192 = vmatpush1.msra.mxu0 %v180
    %193 = vmatprep.subr.mxu0 0.0
    %194 = vmatpush1.msra.mxu0 %v179
    %195 = vmatprep.subr.mxu0 0.0
    %196 = vmatpush1.msra.mxu0 %v178
    %197 = vmatprep.subr.mxu0 0.0
    %198 = vmatpush1.msra.mxu0 %v177
    %199 = vmatprep.subr.mxu0 0.0
    %200 = vmatpush1.msra.mxu0 %v176
    %201 = vmatprep.subr.mxu0 0.0
    %202 = vmatpush1.msra.mxu0 %v175
    %203 = vmatprep.subr.mxu0 0.0
    %204 = vmatpush1.msra.mxu0 %v174
    %205 = vmatprep.subr.mxu0 0.0
    %206 = vmatpush1.msra.mxu0 %v173
    %207 = vmatprep.subr.mxu0 0.0
    %208 = vmatpush1.msra.mxu0 %v172
    %209 = vmatprep.subr.mxu0 0.0
    %210 = vmatpush1.msra.mxu0 %v171
    %211 = vmatprep.subr.mxu0 0.0
    %212 = vmatpush1.msra.mxu0 %v170
    %213 = vmatprep.subr.mxu0 0.0
    %214 = vmatpush1.msra.mxu0 %v169
    %215 = vmatprep.subr.mxu0 0.0
    %216 = vmatpush1.msra.mxu0 %v168
    %217 = vmatprep.subr.mxu0 0.0
    %218 = vmatpush1.msra.mxu0 %v167
    %219 = vmatprep.subr.mxu0 0.0
    %220 = vmatpush1.msra.mxu0 %v166
    %221 = vmatprep.subr.mxu0 0.0
    %222 = vmatpush2.msra.mxu0 0.0
    %223 = vmatprep.subr.mxu0 0.0
    %224 = vmatpush2.msra.mxu0 0.0
    %225 = vmatprep.subr.mxu0 0.0
    %226 = vmatpush2.msra.mxu0 0.0
    %227 = vmatprep.subr.mxu0 0.0
    %228 = vmatpush2.msra.mxu0 0.0
    %229 = vmatprep.subr.mxu0 0.0
    %230 = vmatpush2.msra.mxu0 0.0
    %231 = vmatprep.subr.mxu0 0.0
    %232 = vmatpush2.msra.mxu0 0.0
    %233 = vmatprep.subr.mxu0 0.0
    %234 = vmatpush2.msra.mxu0 0.0
    %235 = vmatprep.subr.mxu0 0.0
    %236 = vmatpush2.msra.mxu0 0.0
    %237 = vmatprep.subr.mxu0 0.0
    %238 = vmatpush2.msra.mxu0 0.0
    %239 = vmatprep.subr.mxu0 0.0
    %240 = vmatpush2.msra.mxu0 0.0
    %241 = vmatprep.subr.mxu0 0.0
    %242 = vmatpush2.msra.mxu0 0.0
    %243 = vmatprep.subr.mxu0 0.0
    %244 = vmatpush2.msra.mxu0 0.0
    %245 = vmatprep.subr.mxu0 0.0
    %246 = vmatpush2.msra.mxu0 0.0
    %247 = vmatprep.subr.mxu0 0.0
    %248 = vmatpush2.msra.mxu0 0.0
    %249 = vmatprep.subr.mxu0 0.0
    %250 = vmatpush2.msra.mxu0 0.0
    %251 = vmatprep.subr.mxu0 0.0
    %252 = vmatpush2.msra.mxu0 0.0
    %253 = vmatprep.mubr.f32.mxu0 0.0
    %254 = vmatmul.mubr.f32.gmra.mxu0 %v165
    %v255 = vpop.f32.mrf.mxu0
    %v256 = vadd.f32 %v187, %v255
    %v257 = vpop.f32.mrf.mxu0
    %258 = vdwg.mxu0
    %v259 = vmul.f32 %v256, 0.15
    %v260 = vmax.f32 %v256, %v259
    %s261 = scalar_lea.vmem [#allocation7], 128
    %v262 = vld [vmem:[%s261] sm:$0xff]
    %v263 = vld [vmem:[%s261 + $0x8] sm:$0xff]
    %v264 = vld [vmem:[%s261 + $0x10] sm:$0xff]
    %v265 = vld [vmem:[%s261 + $0x18] sm:$0xff]
    %v266 = vld [vmem:[%s261 + $0x20] sm:$0xff]
    %v267 = vld [vmem:[%s261 + $0x28] sm:$0xff]
    %v268 = vld [vmem:[%s261 + $0x30] sm:$0xff]
    %v269 = vld [vmem:[%s261 + $0x38] sm:$0xff]
    %v270 = vld [vmem:[%s261 + $0x40] sm:$0xff]
    %v271 = vld [vmem:[%s261 + $0x48] sm:$0xff]
    %v272 = vld [vmem:[%s261 + $0x50] sm:$0xff]
    %v273 = vld [vmem:[%s261 + $0x58] sm:$0xff]
    %v274 = vld [vmem:[%s261 + $0x60] sm:$0xff]
    %v275 = vld [vmem:[%s261 + $0x68] sm:$0xff]
    %v276 = vld [vmem:[%s261 + $0x70] sm:$0xff]
    %v277 = vld [vmem:[%s261 + $0x78] sm:$0xff]
    %s278 = scalar_lea.vmem %s4, 1
    %v279 = vld [vmem:[%s278] sm:$0x1]
    %v281 = vlaneseq
    %v282 = vshrl.u32 %v281, 7
    %v283 = vsub.s32 0, %v282
    %v284 = vrot.slane %v279, %v283
    %286 = vmatprep.subr.mxu0 0.0
    %287 = vmatpush1.msra.mxu0 %v277
    %288 = vmatprep.subr.mxu0 0.0
    %289 = vmatpush1.msra.mxu0 %v276
    %290 = vmatprep.subr.mxu0 0.0
    %291 = vmatpush1.msra.mxu0 %v275
    %292 = vmatprep.subr.mxu0 0.0
    %293 = vmatpush1.msra.mxu0 %v274
    %294 = vmatprep.subr.mxu0 0.0
    %295 = vmatpush1.msra.mxu0 %v273
    %296 = vmatprep.subr.mxu0 0.0
    %297 = vmatpush1.msra.mxu0 %v272
    %298 = vmatprep.subr.mxu0 0.0
    %299 = vmatpush1.msra.mxu0 %v271
    %300 = vmatprep.subr.mxu0 0.0
    %301 = vmatpush1.msra.mxu0 %v270
    %302 = vmatprep.subr.mxu0 0.0
    %303 = vmatpush1.msra.mxu0 %v269
    %304 = vmatprep.subr.mxu0 0.0
    %305 = vmatpush1.msra.mxu0 %v268
    %306 = vmatprep.subr.mxu0 0.0
    %307 = vmatpush1.msra.mxu0 %v267
    %308 = vmatprep.subr.mxu0 0.0
    %309 = vmatpush1.msra.mxu0 %v266
    %310 = vmatprep.subr.mxu0 0.0
    %311 = vmatpush1.msra.mxu0 %v265
    %312 = vmatprep.subr.mxu0 0.0
    %313 = vmatpush1.msra.mxu0 %v264
    %314 = vmatprep.subr.mxu0 0.0
    %315 = vmatpush1.msra.mxu0 %v263
    %316 = vmatprep.subr.mxu0 0.0
    %317 = vmatpush1.msra.mxu0 %v262
    %318 = vmatprep.subr.mxu0 0.0
    %319 = vmatpush2.msra.mxu0 0.0
    %320 = vmatprep.subr.mxu0 0.0
    %321 = vmatpush2.msra.mxu0 0.0
    %322 = vmatprep.subr.mxu0 0.0
    %323 = vmatpush2.msra.mxu0 0.0
    %324 = vmatprep.subr.mxu0 0.0
    %325 = vmatpush2.msra.mxu0 0.0
    %326 = vmatprep.subr.mxu0 0.0
    %327 = vmatpush2.msra.mxu0 0.0
    %328 = vmatprep.subr.mxu0 0.0
    %329 = vmatpush2.msra.mxu0 0.0
    %330 = vmatprep.subr.mxu0 0.0
    %331 = vmatpush2.msra.mxu0 0.0
    %332 = vmatprep.subr.mxu0 0.0
    %333 = vmatpush2.msra.mxu0 0.0
    %334 = vmatprep.subr.mxu0 0.0
    %335 = vmatpush2.msra.mxu0 0.0
    %336 = vmatprep.subr.mxu0 0.0
    %337 = vmatpush2.msra.mxu0 0.0
    %338 = vmatprep.subr.mxu0 0.0
    %339 = vmatpush2.msra.mxu0 0.0
    %340 = vmatprep.subr.mxu0 0.0
    %341 = vmatpush2.msra.mxu0 0.0
    %342 = vmatprep.subr.mxu0 0.0
    %343 = vmatpush2.msra.mxu0 0.0
    %344 = vmatprep.subr.mxu0 0.0
    %345 = vmatpush2.msra.mxu0 0.0
    %346 = vmatprep.subr.mxu0 0.0
    %347 = vmatpush2.msra.mxu0 0.0
    %348 = vmatprep.subr.mxu0 0.0
    %349 = vmatpush2.msra.mxu0 0.0
    %350 = vmatprep.mubr.f32.mxu0 0.0
    %351 = vmatmul.mubr.f32.gmra.mxu0 %v260
    %v352 = vpop.f32.mrf.mxu0
    %v353 = vadd.f32 %v284, %v352
    %v354 = vpop.f32.mrf.mxu0
    %355 = vdwg.mxu0
    %v356 = vmul.f32 %v353, 0.15
    %v357 = vmax.f32 %v353, %v356
    %v358 = vld [vmem:[#allocation8] sm:$0xff]
    %v359 = vld [vmem:[#allocation8 + $0x8] sm:$0xff]
    %v360 = vld [vmem:[#allocation8 + $0x10] sm:$0xff]
    %v361 = vld [vmem:[#allocation8 + $0x18] sm:$0xff]
    %v362 = vld [vmem:[#allocation8 + $0x20] sm:$0xff]
    %v363 = vld [vmem:[#allocation8 + $0x28] sm:$0xff]
    %v364 = vld [vmem:[#allocation8 + $0x30] sm:$0xff]
    %v365 = vld [vmem:[#allocation8 + $0x38] sm:$0xff]
    %v366 = vld [vmem:[#allocation8 + $0x40] sm:$0xff]
    %v367 = vld [vmem:[#allocation8 + $0x48] sm:$0xff]
    %v368 = vld [vmem:[#allocation8 + $0x50] sm:$0xff]
    %v369 = vld [vmem:[#allocation8 + $0x58] sm:$0xff]
    %v370 = vld [vmem:[#allocation8 + $0x60] sm:$0xff]
    %v371 = vld [vmem:[#allocation8 + $0x68] sm:$0xff]
    %v372 = vld [vmem:[#allocation8 + $0x70] sm:$0xff]
    %v373 = vld [vmem:[#allocation8 + $0x78] sm:$0xff]
    %v374 = vld [vmem:[%s6] sm:$0x1]
    %v376 = vlaneseq
    %v377 = vshrl.u32 %v376, 7
    %v378 = vsub.s32 0, %v377
    %v379 = vrot.slane %v374, %v378
    %381 = vmatprep.subr.mxu0 0.0
    %382 = vmatpush1.msra.mxu0 %v373
    %383 = vmatprep.subr.mxu0 0.0
    %384 = vmatpush1.msra.mxu0 %v372
    %385 = vmatprep.subr.mxu0 0.0
    %386 = vmatpush1.msra.mxu0 %v371
    %387 = vmatprep.subr.mxu0 0.0
    %388 = vmatpush1.msra.mxu0 %v370
    %389 = vmatprep.subr.mxu0 0.0
    %390 = vmatpush1.msra.mxu0 %v369
    %391 = vmatprep.subr.mxu0 0.0
    %392 = vmatpush1.msra.mxu0 %v368
    %393 = vmatprep.subr.mxu0 0.0
    %394 = vmatpush1.msra.mxu0 %v367
    %395 = vmatprep.subr.mxu0 0.0
    %396 = vmatpush1.msra.mxu0 %v366
    %397 = vmatprep.subr.mxu0 0.0
    %398 = vmatpush1.msra.mxu0 %v365
    %399 = vmatprep.subr.mxu0 0.0
    %400 = vmatpush1.msra.mxu0 %v364
    %401 = vmatprep.subr.mxu0 0.0
    %402 = vmatpush1.msra.mxu0 %v363
    %403 = vmatprep.subr.mxu0 0.0
    %404 = vmatpush1.msra.mxu0 %v362
    %405 = vmatprep.subr.mxu0 0.0
    %406 = vmatpush1.msra.mxu0 %v361
    %407 = vmatprep.subr.mxu0 0.0
    %408 = vmatpush1.msra.mxu0 %v360
    %409 = vmatprep.subr.mxu0 0.0
    %410 = vmatpush1.msra.mxu0 %v359
    %411 = vmatprep.subr.mxu0 0.0
    %412 = vmatpush1.msra.mxu0 %v358
    %413 = vmatprep.subr.mxu0 0.0
    %414 = vmatpush2.msra.mxu0 0.0
    %415 = vmatprep.subr.mxu0 0.0
    %416 = vmatpush2.msra.mxu0 0.0
    %417 = vmatprep.subr.mxu0 0.0
    %418 = vmatpush2.msra.mxu0 0.0
    %419 = vmatprep.subr.mxu0 0.0
    %420 = vmatpush2.msra.mxu0 0.0
    %421 = vmatprep.subr.mxu0 0.0
    %422 = vmatpush2.msra.mxu0 0.0
    %423 = vmatprep.subr.mxu0 0.0
    %424 = vmatpush2.msra.mxu0 0.0
    %425 = vmatprep.subr.mxu0 0.0
    %426 = vmatpush2.msra.mxu0 0.0
    %427 = vmatprep.subr.mxu0 0.0
    %428 = vmatpush2.msra.mxu0 0.0
    %429 = vmatprep.subr.mxu0 0.0
    %430 = vmatpush2.msra.mxu0 0.0
    %431 = vmatprep.subr.mxu0 0.0
    %432 = vmatpush2.msra.mxu0 0.0
    %433 = vmatprep.subr.mxu0 0.0
    %434 = vmatpush2.msra.mxu0 0.0
    %435 = vmatprep.subr.mxu0 0.0
    %436 = vmatpush2.msra.mxu0 0.0
    %437 = vmatprep.subr.mxu0 0.0
    %438 = vmatpush2.msra.mxu0 0.0
    %439 = vmatprep.subr.mxu0 0.0
    %440 = vmatpush2.msra.mxu0 0.0
    %441 = vmatprep.subr.mxu0 0.0
    %442 = vmatpush2.msra.mxu0 0.0
    %443 = vmatprep.subr.mxu0 0.0
    %444 = vmatpush2.msra.mxu0 0.0
    %445 = vmatprep.mubr.f32.mxu0 0.0
    %446 = vmatmul.mubr.f32.gmra.mxu0 %v357
    %v447 = vpop.f32.mrf.mxu0
    %v448 = vadd.f32 %v379, %v447
    %v449 = vpop.f32.mrf.mxu0
    %450 = vdwg.mxu0
    %451 = vst [vmem:[#allocation10] sm:$0xff] %v448
    // Predicated region
    $region46: #{tpu_custom_call.1} parent=1 // pred_check
      _
    $region47: #{tpu_custom_call.1} parent=1 // pred_check_branch
      %453 = sbr.rel (0) target = $region49
    $region48: #{tpu_custom_call.1} parent=1 // pred_region
      %s455 = ssub.s32 128, 128
      %456 = vsyncadd [#allocation4], %s455
      %s458 = sshll.u32 [#allocation10], 4
      %s459 = int_to_ptr.vmem [resolvable:$true] %s458
      %461 = dma.vmem_to_hbm [thread:$0]  %s459, 128, %s7, [#allocation4]
    $region49: #{tpu_custom_call.1} parent=1 // pred_fallthru
      _
    // Predicated region
    $region50: #{tpu_custom_call.1} parent=1 // pred_check
      _
    $region51: #{tpu_custom_call.1} parent=1 // pred_check_branch
      %463 = sbr.rel (0) target = $region53
    $region52: #{tpu_custom_call.1} parent=1 // pred_region
      %464 = dma.done [#allocation4], 128
    $region53: #{tpu_custom_call.1} parent=1 // pred_fallthru
      _
    %465 = vsyncpa [#allocation3], 1
    %466 = vsyncpa [#allocation6], 1
    %467 = vsyncpa [#allocation9], 1
    %468 = vsyncpa [#allocation4], 1

// kernel: tpu_custom_call.1
$region0: #{tpu_custom_call.1}
  #allocation0 [shape = 'u32[]', space=smem, size = 0x4, offset = 0x4, fixed_abs, tag = 'smem constant byte address 0x4 - core index']
  #allocation1 [shape = 'u32[144,128]{1,0:T(1,128)}', space=vmem, size = 0x12000, scoped, tag = 'internal scratch']
  %s0 = inlined_call_operand.hbm [shape: f32[8,16], index: 0, kind: input, shape index: {}]
  %s1 = inlined_call_operand.hbm [shape: f32[16,128], index: 1, kind: input, shape index: {}]
  %s2 = inlined_call_operand.vmem [shape: f32[1,128], index: 2, kind: input, shape index: {}]
  %s3 = inlined_call_operand.hbm [shape: f32[2,128,128], index: 3, kind: input, shape index: {}]
  %s4 = inlined_call_operand.vmem [shape: f32[2,1,128], index: 4, kind: input, shape index: {}]
  %s5 = inlined_call_operand.hbm [shape: f32[128,128], index: 5, kind: input, shape index: {}]
  %s6 = inlined_call_operand.vmem [shape: f32[1,128], index: 6, kind: input, shape index: {}]
  %s7 = inlined_call_operand.hbm [shape: f32[8,128], index: 7, kind: output, shape index: {}]
  %s8 = sld [smem:[#allocation0]]
  $region54: #{tpu_custom_call.1} parent=0
    _
  %s10 = ssub.s32 1, %s8
  %s11 = scalar_select 0, %s10, %s8
  $region1: #{tpu_custom_call.1} parent=0
    #allocation2 [shape = 'u8[4096]{0}', space=vmem, size = 0x1000, scoped, tag = 'input window, operand 0, single buffered']
    #allocation3 [shape = 's32[1]{0}', space=sflag, size = 0x4, scoped, tag = 'scoped memory for tpu_custom_call.1']
    #allocation4 [shape = 's32[1]{0}', space=sflag, size = 0x4, scoped, tag = 'scoped memory for tpu_custom_call.1']
    #allocation5 [shape = 'u8[8192]{0}', space=vmem, size = 0x2000, scoped, tag = 'input window, operand 1, single buffered']
    #allocation6 [shape = 's32[1]{0}', space=sflag, size = 0x4, scoped, tag = 'scoped memory for tpu_custom_call.1']
    #allocation7 [shape = 'u8[131072]{0}', space=vmem, size = 0x20000, scoped, tag = 'input window, operand 3, single buffered']
    #allocation8 [shape = 'u8[65536]{0}', space=vmem, size = 0x10000, scoped, tag = 'input window, operand 5, single buffered']
    #allocation9 [shape = 's32[1]{0}', space=sflag, size = 0x4, scoped, tag = 'scoped memory for tpu_custom_call.1']
    #allocation10 [shape = 'u8[4096]{0}', space=vmem, size = 0x1000, scoped, tag = 'output window, operand 0, single buffered']
    %12 = vsyncpa [#allocation3], 0
    %13 = vsyncpa [#allocation6], 0
    %14 = vsyncpa [#allocation9], 0
    %15 = vsyncpa [#allocation4], 0
    // Predicated region
    $region2: #{tpu_custom_call.1} parent=1 // pred_check
      _
    $region3: #{tpu_custom_call.1} parent=1 // pred_check_branch
      %17 = sbr.rel (0) target = $region5
    $region4: #{tpu_custom_call.1} parent=1 // pred_region
      %s19 = ssub.s32 128, 128
      %20 = vsyncadd [#allocation3], %s19
      %s22 = sshll.u32 [#allocation2], 4
      %s23 = int_to_ptr.vmem [resolvable:$true] %s22
      %25 = dma.hbm_to_vmem [thread:$0]  %s0, 128, %s23, [#allocation3]
    $region5: #{tpu_custom_call.1} parent=1 // pred_fallthru
      _
    // Predicated region
    $region6: #{tpu_custom_call.1} parent=1 // pred_check
      _
    $region7: #{tpu_custom_call.1} parent=1 // pred_check_branch
      %27 = sbr.rel (0) target = $region9
    $region8: #{tpu_custom_call.1} parent=1 // pred_region
      %s29 = ssub.s32 256, 256
      %30 = vsyncadd [#allocation6], %s29
      %s31 = sshll.u32 [#allocation5], 4
      %s32 = int_to_ptr.vmem [resolvable:$true] %s31
      %37 = dma.hbm_to_vmem [thread:$0]  %s1, 256, %s32, [#allocation6], 128, 128, 8
    $region9: #{tpu_custom_call.1} parent=1 // pred_fallthru
      _
    // Predicated region
    $region10: #{tpu_custom_call.1} parent=1 // pred_check
      _
    $region11: #{tpu_custom_call.1} parent=1 // pred_check_branch
      %39 = sbr.rel (0) target = $region13
    $region12: #{tpu_custom_call.1} parent=1 // pred_region
      _
    $region13: #{tpu_custom_call.1} parent=1 // pred_fallthru
      _
    // Predicated region
    $region14: #{tpu_custom_call.1} parent=1 // pred_check
      _
    $region15: #{tpu_custom_call.1} parent=1 // pred_check_branch
      %41 = sbr.rel (0) target = $region17
    $region16: #{tpu_custom_call.1} parent=1 // pred_region
      %s43 = ssub.s32 4096, 4096
      %44 = vsyncadd [#allocation6], %s43
      %s45 = sshll.u32 [#allocation7], 4
      %s46 = int_to_ptr.vmem [resolvable:$true] %s45
      %51 = dma.hbm_to_vmem [thread:$0]  %s3, 4096, %s46, [#allocation6], 128, 128, 8
    $region17: #{tpu_custom_call.1} parent=1 // pred_fallthru
      _
    // Predicated region
    $region18: #{tpu_custom_call.1} parent=1 // pred_check
      _
    $region19: #{tpu_custom_call.1} parent=1 // pred_check_branch
      %53 = sbr.rel (0) target = $region21
    $region20: #{tpu_custom_call.1} parent=1 // pred_region
      _
    $region21: #{tpu_custom_call.1} parent=1 // pred_fallthru
      _
    // Predicated region
    $region22: #{tpu_custom_call.1} parent=1 // pred_check
      _
    $region23: #{tpu_custom_call.1} parent=1 // pred_check_branch
      %55 = sbr.rel (0) target = $region25
    $region24: #{tpu_custom_call.1} parent=1 // pred_region
      %s57 = ssub.s32 2048, 2048
      %58 = vsyncadd [#allocation9], %s57
      %s59 = sshll.u32 [#allocation8], 4
      %s60 = int_to_ptr.vmem [resolvable:$true] %s59
      %65 = dma.hbm_to_vmem [thread:$0]  %s5, 2048, %s60, [#allocation9], 128, 128, 8
    $region25: #{tpu_custom_call.1} parent=1 // pred_fallthru
      _
    // Predicated region
    $region26: #{tpu_custom_call.1} parent=1 // pred_check
      _
    $region27: #{tpu_custom_call.1} parent=1 // pred_check_branch
      %67 = sbr.rel (0) target = $region29
    $region28: #{tpu_custom_call.1} parent=1 // pred_region
      _
    $region29: #{tpu_custom_call.1} parent=1 // pred_fallthru
      _
    // Predicated region
    $region30: #{tpu_custom_call.1} parent=1 // pred_check
      _
    $region31: #{tpu_custom_call.1} parent=1 // pred_check_branch
      %69 = sbr.rel (0) target = $region33
    $region32: #{tpu_custom_call.1} parent=1 // pred_region
      %70 = dma.done [#allocation3], 128
    $region33: #{tpu_custom_call.1} parent=1 // pred_fallthru
      _
    // Predicated region
    $region34: #{tpu_custom_call.1} parent=1 // pred_check
      _
    $region35: #{tpu_custom_call.1} parent=1 // pred_check_branch
      %72 = sbr.rel (0) target = $region37
    $region36: #{tpu_custom_call.1} parent=1 // pred_region
      %73 = dma.done [#allocation6], 256
    $region37: #{tpu_custom_call.1} parent=1 // pred_fallthru
      _
    // Predicated region
    $region38: #{tpu_custom_call.1} parent=1 // pred_check
      _
    $region39: #{tpu_custom_call.1} parent=1 // pred_check_branch
      %75 = sbr.rel (0) target = $region41
    $region40: #{tpu_custom_call.1} parent=1 // pred_region
      %76 = dma.done [#allocation6], 4096
    $region41: #{tpu_custom_call.1} parent=1 // pred_fallthru
      _
    // Predicated region
    $region42: #{tpu_custom_call.1} parent=1 // pred_check
      _
    $region43: #{tpu_custom_call.1} parent=1 // pred_check_branch
      %78 = sbr.rel (0) target = $region45
    $region44: #{tpu_custom_call.1} parent=1 // pred_region
      %79 = dma.done [#allocation9], 2048
    $region45: #{tpu_custom_call.1} parent=1 // pred_fallthru
      _
    %v80 = vld [vmem:[#allocation2] sm:$0xff]
    %v81 = vld [vmem:[#allocation5] sm:$0xff]
    %v82 = vld [vmem:[#allocation5 + $0x8] sm:$0xff]
    %v83 = vld [vmem:[%s2] sm:$0x1]
    %v85 = vlaneseq
    %v86 = vshrl.u32 %v85, 7
    %v87 = vsub.s32 0, %v86
    %v88 = vrot.slane %v83, %v87
    %vm90 = vcmask 130048
    %v92 = vsel %vm90, %v80, 0
    %94 = vmatprep.subr.mxu0 0.0
    %95 = vmatpush1.msra.mxu0 0.0
    %96 = vmatprep.subr.mxu0 0.0
    %97 = vmatpush1.msra.mxu0 0.0
    %98 = vmatprep.subr.mxu0 0.0
    %99 = vmatpush1.msra.mxu0 0.0
    %100 = vmatprep.subr.mxu0 0.0
    %101 = vmatpush1.msra.mxu0 0.0
    %102 = vmatprep.subr.mxu0 0.0
    %103 = vmatpush1.msra.mxu0 0.0
    %104 = vmatprep.subr.mxu0 0.0
    %105 = vmatpush1.msra.mxu0 0.0
    %106 = vmatprep.subr.mxu0 0.0
    %107 = vmatpush1.msra.mxu0 0.0
    %108 = vmatprep.subr.mxu0 0.0
    %109 = vmatpush1.msra.mxu0 0.0
    %110 = vmatprep.subr.mxu0 0.0
    %111 = vmatpush1.msra.mxu0 0.0
    %112 = vmatprep.subr.mxu0 0.0
    %113 = vmatpush1.msra.mxu0 0.0
    %114 = vmatprep.subr.mxu0 0.0
    %115 = vmatpush1.msra.mxu0 0.0
    %116 = vmatprep.subr.mxu0 0.0
    %117 = vmatpush1.msra.mxu0 0.0
    %118 = vmatprep.subr.mxu0 0.0
    %119 = vmatpush1.msra.mxu0 0.0
    %120 = vmatprep.subr.mxu0 0.0
    %121 = vmatpush1.msra.mxu0 0.0
    %122 = vmatprep.subr.mxu0 0.0
    %123 = vmatpush1.msra.mxu0 %v82
    %124 = vmatprep.subr.mxu0 0.0
    %125 = vmatpush1.msra.mxu0 %v81
    %126 = vmatprep.subr.mxu0 0.0
    %127 = vmatpush2.msra.mxu0 0.0
    %128 = vmatprep.subr.mxu0 0.0
    %129 = vmatpush2.msra.mxu0 0.0
    %130 = vmatprep.subr.mxu0 0.0
    %131 = vmatpush2.msra.mxu0 0.0
    %132 = vmatprep.subr.mxu0 0.0
    %133 = vmatpush2.msra.mxu0 0.0
    %134 = vmatprep.subr.mxu0 0.0
    %135 = vmatpush2.msra.mxu0 0.0
    %136 = vmatprep.subr.mxu0 0.0
    %137 = vmatpush2.msra.mxu0 0.0
    %138 = vmatprep.subr.mxu0 0.0
    %139 = vmatpush2.msra.mxu0 0.0
    %140 = vmatprep.subr.mxu0 0.0
    %141 = vmatpush2.msra.mxu0 0.0
    %142 = vmatprep.subr.mxu0 0.0
    %143 = vmatpush2.msra.mxu0 0.0
    %144 = vmatprep.subr.mxu0 0.0
    %145 = vmatpush2.msra.mxu0 0.0
    %146 = vmatprep.subr.mxu0 0.0
    %147 = vmatpush2.msra.mxu0 0.0
    %148 = vmatprep.subr.mxu0 0.0
    %149 = vmatpush2.msra.mxu0 0.0
    %150 = vmatprep.subr.mxu0 0.0
    %151 = vmatpush2.msra.mxu0 0.0
    %152 = vmatprep.subr.mxu0 0.0
    %153 = vmatpush2.msra.mxu0 0.0
    %154 = vmatprep.subr.mxu0 0.0
    %155 = vmatpush2.msra.mxu0 0.0
    %156 = vmatprep.subr.mxu0 0.0
    %157 = vmatpush2.msra.mxu0 0.0
    %158 = vmatprep.mubr.f32.mxu0 0.0
    %159 = vmatmul.mubr.f32.gmra.mxu0 %v92
    %v160 = vpop.f32.mrf.mxu0
    %v161 = vadd.f32 %v88, %v160
    %v162 = vpop.f32.mrf.mxu0
    %163 = vdwg.mxu0
    %v164 = vmul.f32 %v161, 0.15
    %v165 = vmax.f32 %v161, %v164
    %v166 = vld [vmem:[#allocation7] sm:$0xff]
    %v167 = vld [vmem:[#allocation7 + $0x8] sm:$0xff]
    %v168 = vld [vmem:[#allocation7 + $0x10] sm:$0xff]
    %v169 = vld [vmem:[#allocation7 + $0x18] sm:$0xff]
    %v170 = vld [vmem:[#allocation7 + $0x20] sm:$0xff]
    %v171 = vld [vmem:[#allocation7 + $0x28] sm:$0xff]
    %v172 = vld [vmem:[#allocation7 + $0x30] sm:$0xff]
    %v173 = vld [vmem:[#allocation7 + $0x38] sm:$0xff]
    %v174 = vld [vmem:[#allocation7 + $0x40] sm:$0xff]
    %v175 = vld [vmem:[#allocation7 + $0x48] sm:$0xff]
    %v176 = vld [vmem:[#allocation7 + $0x50] sm:$0xff]
    %v177 = vld [vmem:[#allocation7 + $0x58] sm:$0xff]
    %v178 = vld [vmem:[#allocation7 + $0x60] sm:$0xff]
    %v179 = vld [vmem:[#allocation7 + $0x68] sm:$0xff]
    %v180 = vld [vmem:[#allocation7 + $0x70] sm:$0xff]
    %v181 = vld [vmem:[#allocation7 + $0x78] sm:$0xff]
    %v182 = vld [vmem:[%s4] sm:$0x1]
    %v184 = vlaneseq
    %v185 = vshrl.u32 %v184, 7
    %v186 = vsub.s32 0, %v185
    %v187 = vrot.slane %v182, %v186
    %189 = vmatprep.subr.mxu0 0.0
    %190 = vmatpush1.msra.mxu0 %v181
    %191 = vmatprep.subr.mxu0 0.0
    %192 = vmatpush1.msra.mxu0 %v180
    %193 = vmatprep.subr.mxu0 0.0
    %194 = vmatpush1.msra.mxu0 %v179
    %195 = vmatprep.subr.mxu0 0.0
    %196 = vmatpush1.msra.mxu0 %v178
    %197 = vmatprep.subr.mxu0 0.0
    %198 = vmatpush1.msra.mxu0 %v177
    %199 = vmatprep.subr.mxu0 0.0
    %200 = vmatpush1.msra.mxu0 %v176
    %201 = vmatprep.subr.mxu0 0.0
    %202 = vmatpush1.msra.mxu0 %v175
    %203 = vmatprep.subr.mxu0 0.0
    %204 = vmatpush1.msra.mxu0 %v174
    %205 = vmatprep.subr.mxu0 0.0
    %206 = vmatpush1.msra.mxu0 %v173
    %207 = vmatprep.subr.mxu0 0.0
    %208 = vmatpush1.msra.mxu0 %v172
    %209 = vmatprep.subr.mxu0 0.0
    %210 = vmatpush1.msra.mxu0 %v171
    %211 = vmatprep.subr.mxu0 0.0
    %212 = vmatpush1.msra.mxu0 %v170
    %213 = vmatprep.subr.mxu0 0.0
    %214 = vmatpush1.msra.mxu0 %v169
    %215 = vmatprep.subr.mxu0 0.0
    %216 = vmatpush1.msra.mxu0 %v168
    %217 = vmatprep.subr.mxu0 0.0
    %218 = vmatpush1.msra.mxu0 %v167
    %219 = vmatprep.subr.mxu0 0.0
    %220 = vmatpush1.msra.mxu0 %v166
    %221 = vmatprep.subr.mxu0 0.0
    %222 = vmatpush2.msra.mxu0 0.0
    %223 = vmatprep.subr.mxu0 0.0
    %224 = vmatpush2.msra.mxu0 0.0
    %225 = vmatprep.subr.mxu0 0.0
    %226 = vmatpush2.msra.mxu0 0.0
    %227 = vmatprep.subr.mxu0 0.0
    %228 = vmatpush2.msra.mxu0 0.0
    %229 = vmatprep.subr.mxu0 0.0
    %230 = vmatpush2.msra.mxu0 0.0
    %231 = vmatprep.subr.mxu0 0.0
    %232 = vmatpush2.msra.mxu0 0.0
    %233 = vmatprep.subr.mxu0 0.0
    %234 = vmatpush2.msra.mxu0 0.0
    %235 = vmatprep.subr.mxu0 0.0
    %236 = vmatpush2.msra.mxu0 0.0
    %237 = vmatprep.subr.mxu0 0.0
    %238 = vmatpush2.msra.mxu0 0.0
    %239 = vmatprep.subr.mxu0 0.0
    %240 = vmatpush2.msra.mxu0 0.0
    %241 = vmatprep.subr.mxu0 0.0
    %242 = vmatpush2.msra.mxu0 0.0
    %243 = vmatprep.subr.mxu0 0.0
    %244 = vmatpush2.msra.mxu0 0.0
    %245 = vmatprep.subr.mxu0 0.0
    %246 = vmatpush2.msra.mxu0 0.0
    %247 = vmatprep.subr.mxu0 0.0
    %248 = vmatpush2.msra.mxu0 0.0
    %249 = vmatprep.subr.mxu0 0.0
    %250 = vmatpush2.msra.mxu0 0.0
    %251 = vmatprep.subr.mxu0 0.0
    %252 = vmatpush2.msra.mxu0 0.0
    %253 = vmatprep.mubr.f32.mxu0 0.0
    %254 = vmatmul.mubr.f32.gmra.mxu0 %v165
    %v255 = vpop.f32.mrf.mxu0
    %v256 = vadd.f32 %v187, %v255
    %v257 = vpop.f32.mrf.mxu0
    %258 = vdwg.mxu0
    %v259 = vmul.f32 %v256, 0.15
    %v260 = vmax.f32 %v256, %v259
    %s261 = scalar_lea.vmem [#allocation7], 128
    %v262 = vld [vmem:[%s261] sm:$0xff]
    %v263 = vld [vmem:[%s261 + $0x8] sm:$0xff]
    %v264 = vld [vmem:[%s261 + $0x10] sm:$0xff]
    %v265 = vld [vmem:[%s261 + $0x18] sm:$0xff]
    %v266 = vld [vmem:[%s261 + $0x20] sm:$0xff]
    %v267 = vld [vmem:[%s261 + $0x28] sm:$0xff]
    %v268 = vld [vmem:[%s261 + $0x30] sm:$0xff]
    %v269 = vld [vmem:[%s261 + $0x38] sm:$0xff]
    %v270 = vld [vmem:[%s261 + $0x40] sm:$0xff]
    %v271 = vld [vmem:[%s261 + $0x48] sm:$0xff]
    %v272 = vld [vmem:[%s261 + $0x50] sm:$0xff]
    %v273 = vld [vmem:[%s261 + $0x58] sm:$0xff]
    %v274 = vld [vmem:[%s261 + $0x60] sm:$0xff]
    %v275 = vld [vmem:[%s261 + $0x68] sm:$0xff]
    %v276 = vld [vmem:[%s261 + $0x70] sm:$0xff]
    %v277 = vld [vmem:[%s261 + $0x78] sm:$0xff]
    %s278 = scalar_lea.vmem %s4, 1
    %v279 = vld [vmem:[%s278] sm:$0x1]
    %v281 = vlaneseq
    %v282 = vshrl.u32 %v281, 7
    %v283 = vsub.s32 0, %v282
    %v284 = vrot.slane %v279, %v283
    %286 = vmatprep.subr.mxu0 0.0
    %287 = vmatpush1.msra.mxu0 %v277
    %288 = vmatprep.subr.mxu0 0.0
    %289 = vmatpush1.msra.mxu0 %v276
    %290 = vmatprep.subr.mxu0 0.0
    %291 = vmatpush1.msra.mxu0 %v275
    %292 = vmatprep.subr.mxu0 0.0
    %293 = vmatpush1.msra.mxu0 %v274
    %294 = vmatprep.subr.mxu0 0.0
    %295 = vmatpush1.msra.mxu0 %v273
    %296 = vmatprep.subr.mxu0 0.0
    %297 = vmatpush1.msra.mxu0 %v272
    %298 = vmatprep.subr.mxu0 0.0
    %299 = vmatpush1.msra.mxu0 %v271
    %300 = vmatprep.subr.mxu0 0.0
    %301 = vmatpush1.msra.mxu0 %v270
    %302 = vmatprep.subr.mxu0 0.0
    %303 = vmatpush1.msra.mxu0 %v269
    %304 = vmatprep.subr.mxu0 0.0
    %305 = vmatpush1.msra.mxu0 %v268
    %306 = vmatprep.subr.mxu0 0.0
    %307 = vmatpush1.msra.mxu0 %v267
    %308 = vmatprep.subr.mxu0 0.0
    %309 = vmatpush1.msra.mxu0 %v266
    %310 = vmatprep.subr.mxu0 0.0
    %311 = vmatpush1.msra.mxu0 %v265
    %312 = vmatprep.subr.mxu0 0.0
    %313 = vmatpush1.msra.mxu0 %v264
    %314 = vmatprep.subr.mxu0 0.0
    %315 = vmatpush1.msra.mxu0 %v263
    %316 = vmatprep.subr.mxu0 0.0
    %317 = vmatpush1.msra.mxu0 %v262
    %318 = vmatprep.subr.mxu0 0.0
    %319 = vmatpush2.msra.mxu0 0.0
    %320 = vmatprep.subr.mxu0 0.0
    %321 = vmatpush2.msra.mxu0 0.0
    %322 = vmatprep.subr.mxu0 0.0
    %323 = vmatpush2.msra.mxu0 0.0
    %324 = vmatprep.subr.mxu0 0.0
    %325 = vmatpush2.msra.mxu0 0.0
    %326 = vmatprep.subr.mxu0 0.0
    %327 = vmatpush2.msra.mxu0 0.0
    %328 = vmatprep.subr.mxu0 0.0
    %329 = vmatpush2.msra.mxu0 0.0
    %330 = vmatprep.subr.mxu0 0.0
    %331 = vmatpush2.msra.mxu0 0.0
    %332 = vmatprep.subr.mxu0 0.0
    %333 = vmatpush2.msra.mxu0 0.0
    %334 = vmatprep.subr.mxu0 0.0
    %335 = vmatpush2.msra.mxu0 0.0
    %336 = vmatprep.subr.mxu0 0.0
    %337 = vmatpush2.msra.mxu0 0.0
    %338 = vmatprep.subr.mxu0 0.0
    %339 = vmatpush2.msra.mxu0 0.0
    %340 = vmatprep.subr.mxu0 0.0
    %341 = vmatpush2.msra.mxu0 0.0
    %342 = vmatprep.subr.mxu0 0.0
    %343 = vmatpush2.msra.mxu0 0.0
    %344 = vmatprep.subr.mxu0 0.0
    %345 = vmatpush2.msra.mxu0 0.0
    %346 = vmatprep.subr.mxu0 0.0
    %347 = vmatpush2.msra.mxu0 0.0
    %348 = vmatprep.subr.mxu0 0.0
    %349 = vmatpush2.msra.mxu0 0.0
    %350 = vmatprep.mubr.f32.mxu0 0.0
    %351 = vmatmul.mubr.f32.gmra.mxu0 %v260
    %v352 = vpop.f32.mrf.mxu0
    %v353 = vadd.f32 %v284, %v352
    %v354 = vpop.f32.mrf.mxu0
    %355 = vdwg.mxu0
    %v356 = vmul.f32 %v353, 0.15
    %v357 = vmax.f32 %v353, %v356
    %v358 = vld [vmem:[#allocation8] sm:$0xff]
    %v359 = vld [vmem:[#allocation8 + $0x8] sm:$0xff]
    %v360 = vld [vmem:[#allocation8 + $0x10] sm:$0xff]
    %v361 = vld [vmem:[#allocation8 + $0x18] sm:$0xff]
    %v362 = vld [vmem:[#allocation8 + $0x20] sm:$0xff]
    %v363 = vld [vmem:[#allocation8 + $0x28] sm:$0xff]
    %v364 = vld [vmem:[#allocation8 + $0x30] sm:$0xff]
    %v365 = vld [vmem:[#allocation8 + $0x38] sm:$0xff]
    %v366 = vld [vmem:[#allocation8 + $0x40] sm:$0xff]
    %v367 = vld [vmem:[#allocation8 + $0x48] sm:$0xff]
    %v368 = vld [vmem:[#allocation8 + $0x50] sm:$0xff]
    %v369 = vld [vmem:[#allocation8 + $0x58] sm:$0xff]
    %v370 = vld [vmem:[#allocation8 + $0x60] sm:$0xff]
    %v371 = vld [vmem:[#allocation8 + $0x68] sm:$0xff]
    %v372 = vld [vmem:[#allocation8 + $0x70] sm:$0xff]
    %v373 = vld [vmem:[#allocation8 + $0x78] sm:$0xff]
    %v374 = vld [vmem:[%s6] sm:$0x1]
    %v376 = vlaneseq
    %v377 = vshrl.u32 %v376, 7
    %v378 = vsub.s32 0, %v377
    %v379 = vrot.slane %v374, %v378
    %381 = vmatprep.subr.mxu0 0.0
    %382 = vmatpush1.msra.mxu0 %v373
    %383 = vmatprep.subr.mxu0 0.0
    %384 = vmatpush1.msra.mxu0 %v372
    %385 = vmatprep.subr.mxu0 0.0
    %386 = vmatpush1.msra.mxu0 %v371
    %387 = vmatprep.subr.mxu0 0.0
    %388 = vmatpush1.msra.mxu0 %v370
    %389 = vmatprep.subr.mxu0 0.0
    %390 = vmatpush1.msra.mxu0 %v369
    %391 = vmatprep.subr.mxu0 0.0
    %392 = vmatpush1.msra.mxu0 %v368
    %393 = vmatprep.subr.mxu0 0.0
    %394 = vmatpush1.msra.mxu0 %v367
    %395 = vmatprep.subr.mxu0 0.0
    %396 = vmatpush1.msra.mxu0 %v366
    %397 = vmatprep.subr.mxu0 0.0
    %398 = vmatpush1.msra.mxu0 %v365
    %399 = vmatprep.subr.mxu0 0.0
    %400 = vmatpush1.msra.mxu0 %v364
    %401 = vmatprep.subr.mxu0 0.0
    %402 = vmatpush1.msra.mxu0 %v363
    %403 = vmatprep.subr.mxu0 0.0
    %404 = vmatpush1.msra.mxu0 %v362
    %405 = vmatprep.subr.mxu0 0.0
    %406 = vmatpush1.msra.mxu0 %v361
    %407 = vmatprep.subr.mxu0 0.0
    %408 = vmatpush1.msra.mxu0 %v360
    %409 = vmatprep.subr.mxu0 0.0
    %410 = vmatpush1.msra.mxu0 %v359
    %411 = vmatprep.subr.mxu0 0.0
    %412 = vmatpush1.msra.mxu0 %v358
    %413 = vmatprep.subr.mxu0 0.0
    %414 = vmatpush2.msra.mxu0 0.0
    %415 = vmatprep.subr.mxu0 0.0
    %416 = vmatpush2.msra.mxu0 0.0
    %417 = vmatprep.subr.mxu0 0.0
    %418 = vmatpush2.msra.mxu0 0.0
    %419 = vmatprep.subr.mxu0 0.0
    %420 = vmatpush2.msra.mxu0 0.0
    %421 = vmatprep.subr.mxu0 0.0
    %422 = vmatpush2.msra.mxu0 0.0
    %423 = vmatprep.subr.mxu0 0.0
    %424 = vmatpush2.msra.mxu0 0.0
    %425 = vmatprep.subr.mxu0 0.0
    %426 = vmatpush2.msra.mxu0 0.0
    %427 = vmatprep.subr.mxu0 0.0
    %428 = vmatpush2.msra.mxu0 0.0
    %429 = vmatprep.subr.mxu0 0.0
    %430 = vmatpush2.msra.mxu0 0.0
    %431 = vmatprep.subr.mxu0 0.0
    %432 = vmatpush2.msra.mxu0 0.0
    %433 = vmatprep.subr.mxu0 0.0
    %434 = vmatpush2.msra.mxu0 0.0
    %435 = vmatprep.subr.mxu0 0.0
    %436 = vmatpush2.msra.mxu0 0.0
    %437 = vmatprep.subr.mxu0 0.0
    %438 = vmatpush2.msra.mxu0 0.0
    %439 = vmatprep.subr.mxu0 0.0
    %440 = vmatpush2.msra.mxu0 0.0
    %441 = vmatprep.subr.mxu0 0.0
    %442 = vmatpush2.msra.mxu0 0.0
    %443 = vmatprep.subr.mxu0 0.0
    %444 = vmatpush2.msra.mxu0 0.0
    %445 = vmatprep.mubr.f32.mxu0 0.0
    %446 = vmatmul.mubr.f32.gmra.mxu0 %v357
    %v447 = vpop.f32.mrf.mxu0
    %v448 = vadd.f32 %v379, %v447
    %v449 = vpop.f32.mrf.mxu0
    %450 = vdwg.mxu0
    %451 = vst [vmem:[#allocation10] sm:$0xff] %v448
    // Predicated region
    $region46: #{tpu_custom_call.1} parent=1 // pred_check
      _
    $region47: #{tpu_custom_call.1} parent=1 // pred_check_branch
      %453 = sbr.rel (0) target = $region49
    $region48: #{tpu_custom_call.1} parent=1 // pred_region
      %s455 = ssub.s32 128, 128
      %456 = vsyncadd [#allocation4], %s455
      %s458 = sshll.u32 [#allocation10], 4
      %s459 = int_to_ptr.vmem [resolvable:$true] %s458
      %461 = dma.vmem_to_hbm [thread:$0]  %s459, 128, %s7, [#allocation4]
    $region49: #{tpu_custom_call.1} parent=1 // pred_fallthru
      _
    // Predicated region
    $region50: #{tpu_custom_call.1} parent=1 // pred_check
      _
    $region51: #{tpu_custom_call.1} parent=1 // pred_check_branch
      %463 = sbr.rel (0) target = $region53
    $region52: #{tpu_custom_call.1} parent=1 // pred_region
      %464 = dma.done [#allocation4], 128
    $region53: #{tpu_custom_call.1} parent=1 // pred_fallthru
      _
    %465 = vsyncpa [#allocation3], 1
    %466 = vsyncpa [#allocation6], 1
    %467 = vsyncpa [#allocation9], 1
    %468 = vsyncpa [#allocation4], 1

</llo_original>
